<compile_context>
chip_gen: v6e
topology: v6e:2x2x1
jax: 0.10.0
libtpu: 0.0.40
codegen_flags: <defaults>
</compile_context>

<pallas_src>
import jax
import jax.numpy as jnp
from jax.experimental import pallas as pl
from jax.experimental.pallas import tpu as pltpu


def _round_up(x, m):
    return ((x + m - 1) // m) * m


def decoder_kernel(x_ref, w1_ref, b1_ref, w2_ref, b2_ref, w3_ref, b3_ref, o_ref):
    cdt = w1_ref.dtype                      # MXU operand dtype (bf16 by default)
    x = x_ref[...].astype(cdt)
    # Layer 1: Linear + ReLU (MXU accumulates in f32; bias/ReLU stay f32 on the VPU).
    h1 = jnp.dot(x, w1_ref[...], preferred_element_type=jnp.float32)
    h1 = jnp.maximum(h1 + b1_ref[...], 0.0)
    # Layer 2: Linear + ReLU.
    h2 = jnp.dot(h1.astype(cdt), w2_ref[...], preferred_element_type=jnp.float32)
    h2 = jnp.maximum(h2 + b2_ref[...], 0.0)
    # Layer 3: Linear (no activation).
    out = jnp.dot(h2.astype(cdt), w3_ref[...], preferred_element_type=jnp.float32)
    out = out + b3_ref[...]
    o_ref[...] = out.astype(o_ref.dtype)


def prepare_params(params, compute_dtype=jnp.bfloat16):
    """One-time (hoisted) weight cast + bias reshape. Biases stay f32 for the epilogue."""
    def w(a):
        return jnp.asarray(a, compute_dtype)

    def b(a):
        return jnp.asarray(a, jnp.float32).reshape(1, -1)

    return dict(w1=w(params["w1"]), b1=b(params["b1"]),
                w2=w(params["w2"]), b2=b(params["b2"]),
                w3=w(params["w3"]), b3=b(params["b3"]))


def _choose_batch_tile(B, cap=256):
    """Batch-tile rows: <= B, multiple of 8 (16-aligned when possible), capped at
    `cap`, and split into >= 2 grid steps when the batch is large enough so
    ("parallel",) can use both TensorCores on v7x."""
    if B <= 8:
        return B                              # one block == full batch dim (full-dim exemption)
    tm = min(cap, (B // 8) * 8)
    if tm >= 32 and tm % 16:
        tm -= 8                               # prefer bf16-native 16-row alignment
    if B >= 32 and pl.cdiv(B, tm) < 2:
        tm = max(16, _round_up(tm // 2, 8))   # keep >= 2 grid steps (v7x megacore)
    return tm


def decoder_forward(x, prepared, *, tm=None):
    """x: (B, hidden_dim). prepared: output of prepare_params (weights [in, out])."""
    w1, b1 = prepared["w1"], prepared["b1"]
    w2, b2 = prepared["w2"], prepared["b2"]
    w3, b3 = prepared["w3"], prepared["b3"]
    B, H = x.shape
    L = w1.shape[1]
    D = w3.shape[1]
    assert w1.shape[0] == H and w2.shape == (L, L) and w3.shape[0] == L

    if tm is None:
        tm = _choose_batch_tile(B)
    num_tiles = pl.cdiv(B, tm)
    out_dtype = x.dtype

    # Right-sized VMEM budget: resident consts (assume up to 2 buffers), double-
    # buffered x/out tiles, rough intermediate scratch, then 2x headroom; capped
    # well under v7x's 64 MiB per-TC physical VMEM.
    nbytes = lambda a: a.size * a.dtype.itemsize
    const_bytes = sum(nbytes(a) for a in (w1, b1, w2, b2, w3, b3))
    stream_bytes = 2 * tm * (H * x.dtype.itemsize + D * jnp.dtype(out_dtype).itemsize)
    interm_bytes = 6 * tm * max(H, L, D) * 4
    vmem_limit = int(min(48 * 1024 * 1024,
                         max(16 * 1024 * 1024,
                             2 * (2 * const_bytes + stream_bytes + interm_bytes))))

    flops = 2 * B * (H * L + L * L + L * D)
    bytes_accessed = int(nbytes(x) + const_bytes
                         + B * D * jnp.dtype(out_dtype).itemsize)

    row_in_spec = pl.BlockSpec((tm, H), lambda i: (i, 0))
    out_spec = pl.BlockSpec((tm, D), lambda i: (i, 0))

    def build_in_specs(single_buffer_consts):
        def const_spec(arr):
            if single_buffer_consts:
                # Constant across the grid -> one resident buffer is enough.
                return pl.BlockSpec(arr.shape, lambda i: (0, 0),
                                    pipeline_mode=pl.Buffered(1))
            return pl.BlockSpec(arr.shape, lambda i: (0, 0))

        return [row_in_spec,
                const_spec(w1), const_spec(b1),
                const_spec(w2), const_spec(b2),
                const_spec(w3), const_spec(b3)]

    def run(in_specs):
        return pl.pallas_call(
            decoder_kernel,
            out_shape=jax.ShapeDtypeStruct((B, D), out_dtype),
            grid=(num_tiles,),
            in_specs=in_specs,
            out_specs=out_spec,
            compiler_params=pltpu.CompilerParams(
                dimension_semantics=("parallel",),
                vmem_limit_bytes=vmem_limit,
            ),
            cost_estimate=pl.CostEstimate(
                flops=flops, transcendentals=0, bytes_accessed=bytes_accessed),
        )(x, w1, b1, w2, b2, w3, b3)

    try:
        return run(build_in_specs(single_buffer_consts=True))
    except Exception:
        # Some Pallas builds reject single-buffered (Buffered(1)) constant specs;
        # fall back to default double-buffering (identical results, a bit more VMEM).
        return run(build_in_specs(single_buffer_consts=False))


def init_params(key, hidden_dim, latent_dim, d):
    """Deterministic init mimicking nn.Linear default (uniform(-1/sqrt(fan_in), ...))."""
    ks = jax.random.split(key, 6)

    def lin(kw, kb, fan_in, fan_out):
        bound = 1.0 / jnp.sqrt(float(fan_in))
        w = jax.random.uniform(kw, (fan_in, fan_out), jnp.float32, -bound, bound)
        b = jax.random.uniform(kb, (1, fan_out), jnp.float32, -bound, bound)
        return w, b

    w1, b1 = lin(ks[0], ks[1], hidden_dim, latent_dim)
    w2, b2 = lin(ks[2], ks[3], latent_dim, latent_dim)
    w3, b3 = lin(ks[4], ks[5], latent_dim, d)
    return dict(w1=w1, b1=b1, w2=w2, b2=b2, w3=w3, b3=b3)


def reference_forward(x, p):
    h1 = jnp.maximum(x @ p["w1"] + p["b1"], 0.0)
    h2 = jnp.maximum(h1 @ p["w2"] + p["b2"], 0.0)
    return h2 @ p["w3"] + p["b3"]


if __name__ == "__main__":
    key = jax.random.PRNGKey(0)
    k_x, k_p = jax.random.split(key)

    # Small shapes consistent with Decoder(hidden_dim, latent_dim, d)
    batch, hidden_dim, latent_dim, d = 8, 32, 32, 16

    x = jax.random.normal(k_x, (batch, hidden_dim), dtype=jnp.float32)
    params = init_params(k_p, hidden_dim, latent_dim, d)
    ref = reference_forward(x, params)

    # Default bf16-MXU path (f32 accumulation + f32 epilogue); weight cast hoisted.
    p_bf16 = prepare_params(params)
    out = jax.block_until_ready(decoder_forward(x, p_bf16))
    assert out.shape == (batch, d), out.shape
    assert out.dtype == x.dtype, out.dtype
    assert jnp.allclose(out, ref, atol=1e-1, rtol=1e-1), "bf16 mismatch vs reference"

    # f32-operand path (near-exact vs the jnp reference).
    p_f32 = prepare_params(params, compute_dtype=jnp.float32)
    out_f32 = jax.block_until_ready(decoder_forward(x, p_f32))
    assert out_f32.shape == (batch, d), out_f32.shape
    assert jnp.allclose(out_f32, ref, atol=1e-4, rtol=1e-4), "f32 mismatch vs reference"

    print("KERNEL_OK")
</pallas_src>

<mosaic_0001>
module attributes {stable_mosaic.version = 11 : i64} {
  func.func @decoder_kernel(%arg0: i32, %arg1: memref<8x32xf32, #tpu.memory_space<vmem>>, %arg2: memref<32x32xbf16, #tpu.memory_space<vmem>>, %arg3: memref<1x32xf32, #tpu.memory_space<vmem>>, %arg4: memref<32x32xbf16, #tpu.memory_space<vmem>>, %arg5: memref<1x32xf32, #tpu.memory_space<vmem>>, %arg6: memref<32x16xbf16, #tpu.memory_space<vmem>>, %arg7: memref<1x16xf32, #tpu.memory_space<vmem>>, %arg8: memref<8x16xf32, #tpu.memory_space<vmem>>) attributes {dimension_semantics = [#tpu.dimension_semantics<parallel>], iteration_bounds = array<i64: 1>, scalar_prefetch = 0 : i64, scratch_operands = 0 : i64, tpu.core_type = #tpu.core_type<tc>, window_params = [{transform_indices = @transform_0, window_bounds = array<i64: 8, 32>}, {pipeline_mode = #tpu.pipeline_mode<synchronous>, transform_indices = @transform_1, window_bounds = array<i64: 32, 32>}, {pipeline_mode = #tpu.pipeline_mode<synchronous>, transform_indices = @transform_2, window_bounds = array<i64: 1, 32>}, {pipeline_mode = #tpu.pipeline_mode<synchronous>, transform_indices = @transform_3, window_bounds = array<i64: 32, 32>}, {pipeline_mode = #tpu.pipeline_mode<synchronous>, transform_indices = @transform_4, window_bounds = array<i64: 1, 32>}, {pipeline_mode = #tpu.pipeline_mode<synchronous>, transform_indices = @transform_5, window_bounds = array<i64: 32, 16>}, {pipeline_mode = #tpu.pipeline_mode<synchronous>, transform_indices = @transform_6, window_bounds = array<i64: 1, 16>}, {transform_indices = @transform_7, window_bounds = array<i64: 8, 16>}]} {
    %c0 = arith.constant 0 : index
    %c0_0 = arith.constant 0 : index
    %0 = vector.load %arg1[%c0, %c0_0] : memref<8x32xf32, #tpu.memory_space<vmem>>, vector<8x32xf32>
    %1 = arith.truncf %0 : vector<8x32xf32> to vector<8x32xbf16>
    %c0_1 = arith.constant 0 : index
    %c0_2 = arith.constant 0 : index
    %2 = vector.load %arg2[%c0_1, %c0_2] : memref<32x32xbf16, #tpu.memory_space<vmem>>, vector<32x32xbf16>
    %cst = arith.constant dense<0.000000e+00> : vector<8x32xf32>
    %3 = tpu.matmul %1, %2, %cst {dimension_numbers = #tpu.dot_dimension_numbers<[1], [0], [0], [1], [0, 0, 1, 1], [], []>} : vector<8x32xbf16>, vector<32x32xbf16>, vector<8x32xf32> -> vector<8x32xf32>
    %c0_3 = arith.constant 0 : index
    %c0_4 = arith.constant 0 : index
    %4 = vector.load %arg3[%c0_3, %c0_4] : memref<1x32xf32, #tpu.memory_space<vmem>>, vector<1x32xf32>
    %5 = vector.broadcast %4 : vector<1x32xf32> to vector<8x32xf32>
    %6 = arith.addf %3, %5 : vector<8x32xf32>
    %cst_5 = arith.constant 0.000000e+00 : f32
    %7 = vector.broadcast %cst_5 : f32 to vector<8x32xf32>
    %8 = arith.maximumf %6, %7 : vector<8x32xf32>
    %9 = arith.truncf %8 : vector<8x32xf32> to vector<8x32xbf16>
    %c0_6 = arith.constant 0 : index
    %c0_7 = arith.constant 0 : index
    %10 = vector.load %arg4[%c0_6, %c0_7] : memref<32x32xbf16, #tpu.memory_space<vmem>>, vector<32x32xbf16>
    %cst_8 = arith.constant dense<0.000000e+00> : vector<8x32xf32>
    %11 = tpu.matmul %9, %10, %cst_8 {dimension_numbers = #tpu.dot_dimension_numbers<[1], [0], [0], [1], [0, 0, 1, 1], [], []>} : vector<8x32xbf16>, vector<32x32xbf16>, vector<8x32xf32> -> vector<8x32xf32>
    %c0_9 = arith.constant 0 : index
    %c0_10 = arith.constant 0 : index
    %12 = vector.load %arg5[%c0_9, %c0_10] : memref<1x32xf32, #tpu.memory_space<vmem>>, vector<1x32xf32>
    %13 = vector.broadcast %12 : vector<1x32xf32> to vector<8x32xf32>
    %14 = arith.addf %11, %13 : vector<8x32xf32>
    %cst_11 = arith.constant 0.000000e+00 : f32
    %15 = vector.broadcast %cst_11 : f32 to vector<8x32xf32>
    %16 = arith.maximumf %14, %15 : vector<8x32xf32>
    %17 = arith.truncf %16 : vector<8x32xf32> to vector<8x32xbf16>
    %c0_12 = arith.constant 0 : index
    %c0_13 = arith.constant 0 : index
    %18 = vector.load %arg6[%c0_12, %c0_13] : memref<32x16xbf16, #tpu.memory_space<vmem>>, vector<32x16xbf16>
    %cst_14 = arith.constant dense<0.000000e+00> : vector<8x16xf32>
    %19 = tpu.matmul %17, %18, %cst_14 {dimension_numbers = #tpu.dot_dimension_numbers<[1], [0], [0], [1], [0, 0, 1, 1], [], []>} : vector<8x32xbf16>, vector<32x16xbf16>, vector<8x16xf32> -> vector<8x16xf32>
    %c0_15 = arith.constant 0 : index
    %c0_16 = arith.constant 0 : index
    %20 = vector.load %arg7[%c0_15, %c0_16] : memref<1x16xf32, #tpu.memory_space<vmem>>, vector<1x16xf32>
    %21 = vector.broadcast %20 : vector<1x16xf32> to vector<8x16xf32>
    %22 = arith.addf %19, %21 : vector<8x16xf32>
    %c0_17 = arith.constant 0 : index
    %c0_18 = arith.constant 0 : index
    %23 = vector.load %arg8[%c0_17, %c0_18] : memref<8x16xf32, #tpu.memory_space<vmem>>, vector<8x16xf32>
    tpu.vector_store %arg8[%c0_17, %c0_18], %22 {strides = array<i32>} : memref<8x16xf32, #tpu.memory_space<vmem>>, vector<8x16xf32>,
    return
  }
  func.func @transform_0(%arg0: i32) -> (i32, i32) {
    %c0_i32 = arith.constant 0 : i32
    %c0_i32_0 = arith.constant 0 : i32
    return %arg0, %c0_i32 : i32, i32
  }
  func.func @transform_1(%arg0: i32) -> (i32, i32) {
    %c0_i32 = arith.constant 0 : i32
    %c0_i32_0 = arith.constant 0 : i32
    %c0_i32_1 = arith.constant 0 : i32
    return %c0_i32, %c0_i32_0 : i32, i32
  }
  func.func @transform_2(%arg0: i32) -> (i32, i32) {
    %c0_i32 = arith.constant 0 : i32
    %c0_i32_0 = arith.constant 0 : i32
    %c0_i32_1 = arith.constant 0 : i32
    return %c0_i32, %c0_i32_0 : i32, i32
  }
  func.func @transform_3(%arg0: i32) -> (i32, i32) {
    %c0_i32 = arith.constant 0 : i32
    %c0_i32_0 = arith.constant 0 : i32
    %c0_i32_1 = arith.constant 0 : i32
    return %c0_i32, %c0_i32_0 : i32, i32
  }
  func.func @transform_4(%arg0: i32) -> (i32, i32) {
    %c0_i32 = arith.constant 0 : i32
    %c0_i32_0 = arith.constant 0 : i32
    %c0_i32_1 = arith.constant 0 : i32
    return %c0_i32, %c0_i32_0 : i32, i32
  }
  func.func @transform_5(%arg0: i32) -> (i32, i32) {
    %c0_i32 = arith.constant 0 : i32
    %c0_i32_0 = arith.constant 0 : i32
    %c0_i32_1 = arith.constant 0 : i32
    return %c0_i32, %c0_i32_0 : i32, i32
  }
  func.func @transform_6(%arg0: i32) -> (i32, i32) {
    %c0_i32 = arith.constant 0 : i32
    %c0_i32_0 = arith.constant 0 : i32
    %c0_i32_1 = arith.constant 0 : i32
    return %c0_i32, %c0_i32_0 : i32, i32
  }
  func.func @transform_7(%arg0: i32) -> (i32, i32) {
    %c0_i32 = arith.constant 0 : i32
    %c0_i32_0 = arith.constant 0 : i32
    return %arg0, %c0_i32 : i32, i32
  }
}

module attributes {stable_mosaic.version = 11 : i64} {
  func.func @decoder_kernel(%arg0: i32, %arg1: memref<8x32xf32, #tpu.memory_space<vmem>>, %arg2: memref<32x32xbf16, #tpu.memory_space<vmem>>, %arg3: memref<1x32xf32, #tpu.memory_space<vmem>>, %arg4: memref<32x32xbf16, #tpu.memory_space<vmem>>, %arg5: memref<1x32xf32, #tpu.memory_space<vmem>>, %arg6: memref<32x16xbf16, #tpu.memory_space<vmem>>, %arg7: memref<1x16xf32, #tpu.memory_space<vmem>>, %arg8: memref<8x16xf32, #tpu.memory_space<vmem>>) attributes {dimension_semantics = [#tpu.dimension_semantics<parallel>], iteration_bounds = array<i64: 1>, scalar_prefetch = 0 : i64, scratch_operands = 0 : i64, tpu.core_type = #tpu.core_type<tc>, window_params = [{transform_indices = @transform_0, window_bounds = array<i64: 8, 32>}, {pipeline_mode = #tpu.pipeline_mode<synchronous>, transform_indices = @transform_1, window_bounds = array<i64: 32, 32>}, {pipeline_mode = #tpu.pipeline_mode<synchronous>, transform_indices = @transform_2, window_bounds = array<i64: 1, 32>}, {pipeline_mode = #tpu.pipeline_mode<synchronous>, transform_indices = @transform_3, window_bounds = array<i64: 32, 32>}, {pipeline_mode = #tpu.pipeline_mode<synchronous>, transform_indices = @transform_4, window_bounds = array<i64: 1, 32>}, {pipeline_mode = #tpu.pipeline_mode<synchronous>, transform_indices = @transform_5, window_bounds = array<i64: 32, 16>}, {pipeline_mode = #tpu.pipeline_mode<synchronous>, transform_indices = @transform_6, window_bounds = array<i64: 1, 16>}, {transform_indices = @transform_7, window_bounds = array<i64: 8, 16>}]} {
    %c0 = arith.constant 0 : index
    %c0_0 = arith.constant 0 : index
    %0 = vector.load %arg1[%c0, %c0_0] : memref<8x32xf32, #tpu.memory_space<vmem>>, vector<8x32xf32>
    %1 = arith.truncf %0 : vector<8x32xf32> to vector<8x32xbf16>
    %c0_1 = arith.constant 0 : index
    %c0_2 = arith.constant 0 : index
    %2 = vector.load %arg2[%c0_1, %c0_2] : memref<32x32xbf16, #tpu.memory_space<vmem>>, vector<32x32xbf16>
    %cst = arith.constant dense<0.000000e+00> : vector<8x32xf32>
    %3 = tpu.matmul %1, %2, %cst {dimension_numbers = #tpu.dot_dimension_numbers<[1], [0], [0], [1], [0, 0, 1, 1], [], []>} : vector<8x32xbf16>, vector<32x32xbf16>, vector<8x32xf32> -> vector<8x32xf32>
    %c0_3 = arith.constant 0 : index
    %c0_4 = arith.constant 0 : index
    %4 = vector.load %arg3[%c0_3, %c0_4] : memref<1x32xf32, #tpu.memory_space<vmem>>, vector<1x32xf32>
    %5 = vector.broadcast %4 : vector<1x32xf32> to vector<8x32xf32>
    %6 = arith.addf %3, %5 : vector<8x32xf32>
    %cst_5 = arith.constant 0.000000e+00 : f32
    %7 = vector.broadcast %cst_5 : f32 to vector<8x32xf32>
    %8 = arith.maximumf %6, %7 : vector<8x32xf32>
    %9 = arith.truncf %8 : vector<8x32xf32> to vector<8x32xbf16>
    %c0_6 = arith.constant 0 : index
    %c0_7 = arith.constant 0 : index
    %10 = vector.load %arg4[%c0_6, %c0_7] : memref<32x32xbf16, #tpu.memory_space<vmem>>, vector<32x32xbf16>
    %cst_8 = arith.constant dense<0.000000e+00> : vector<8x32xf32>
    %11 = tpu.matmul %9, %10, %cst_8 {dimension_numbers = #tpu.dot_dimension_numbers<[1], [0], [0], [1], [0, 0, 1, 1], [], []>} : vector<8x32xbf16>, vector<32x32xbf16>, vector<8x32xf32> -> vector<8x32xf32>
    %c0_9 = arith.constant 0 : index
    %c0_10 = arith.constant 0 : index
    %12 = vector.load %arg5[%c0_9, %c0_10] : memref<1x32xf32, #tpu.memory_space<vmem>>, vector<1x32xf32>
    %13 = vector.broadcast %12 : vector<1x32xf32> to vector<8x32xf32>
    %14 = arith.addf %11, %13 : vector<8x32xf32>
    %cst_11 = arith.constant 0.000000e+00 : f32
    %15 = vector.broadcast %cst_11 : f32 to vector<8x32xf32>
    %16 = arith.maximumf %14, %15 : vector<8x32xf32>
    %17 = arith.truncf %16 : vector<8x32xf32> to vector<8x32xbf16>
    %c0_12 = arith.constant 0 : index
    %c0_13 = arith.constant 0 : index
    %18 = vector.load %arg6[%c0_12, %c0_13] : memref<32x16xbf16, #tpu.memory_space<vmem>>, vector<32x16xbf16>
    %cst_14 = arith.constant dense<0.000000e+00> : vector<8x16xf32>
    %19 = tpu.matmul %17, %18, %cst_14 {dimension_numbers = #tpu.dot_dimension_numbers<[1], [0], [0], [1], [0, 0, 1, 1], [], []>} : vector<8x32xbf16>, vector<32x16xbf16>, vector<8x16xf32> -> vector<8x16xf32>
    %c0_15 = arith.constant 0 : index
    %c0_16 = arith.constant 0 : index
    %20 = vector.load %arg7[%c0_15, %c0_16] : memref<1x16xf32, #tpu.memory_space<vmem>>, vector<1x16xf32>
    %21 = vector.broadcast %20 : vector<1x16xf32> to vector<8x16xf32>
    %22 = arith.addf %19, %21 : vector<8x16xf32>
    %c0_17 = arith.constant 0 : index
    %c0_18 = arith.constant 0 : index
    %23 = vector.load %arg8[%c0_17, %c0_18] : memref<8x16xf32, #tpu.memory_space<vmem>>, vector<8x16xf32>
    tpu.vector_store %arg8[%c0_17, %c0_18], %22 {strides = array<i32>} : memref<8x16xf32, #tpu.memory_space<vmem>>, vector<8x16xf32>,
    return
  }
  func.func @transform_0(%arg0: i32) -> (i32, i32) {
    %c0_i32 = arith.constant 0 : i32
    %c0_i32_0 = arith.constant 0 : i32
    return %arg0, %c0_i32 : i32, i32
  }
  func.func @transform_1(%arg0: i32) -> (i32, i32) {
    %c0_i32 = arith.constant 0 : i32
    %c0_i32_0 = arith.constant 0 : i32
    %c0_i32_1 = arith.constant 0 : i32
    return %c0_i32, %c0_i32_0 : i32, i32
  }
  func.func @transform_2(%arg0: i32) -> (i32, i32) {
    %c0_i32 = arith.constant 0 : i32
    %c0_i32_0 = arith.constant 0 : i32
    %c0_i32_1 = arith.constant 0 : i32
    return %c0_i32, %c0_i32_0 : i32, i32
  }
  func.func @transform_3(%arg0: i32) -> (i32, i32) {
    %c0_i32 = arith.constant 0 : i32
    %c0_i32_0 = arith.constant 0 : i32
    %c0_i32_1 = arith.constant 0 : i32
    return %c0_i32, %c0_i32_0 : i32, i32
  }
  func.func @transform_4(%arg0: i32) -> (i32, i32) {
    %c0_i32 = arith.constant 0 : i32
    %c0_i32_0 = arith.constant 0 : i32
    %c0_i32_1 = arith.constant 0 : i32
    return %c0_i32, %c0_i32_0 : i32, i32
  }
  func.func @transform_5(%arg0: i32) -> (i32, i32) {
    %c0_i32 = arith.constant 0 : i32
    %c0_i32_0 = arith.constant 0 : i32
    %c0_i32_1 = arith.constant 0 : i32
    return %c0_i32, %c0_i32_0 : i32, i32
  }
  func.func @transform_6(%arg0: i32) -> (i32, i32) {
    %c0_i32 = arith.constant 0 : i32
    %c0_i32_0 = arith.constant 0 : i32
    %c0_i32_1 = arith.constant 0 : i32
    return %c0_i32, %c0_i32_0 : i32, i32
  }
  func.func @transform_7(%arg0: i32) -> (i32, i32) {
    %c0_i32 = arith.constant 0 : i32
    %c0_i32_0 = arith.constant 0 : i32
    return %arg0, %c0_i32 : i32, i32
  }
}

</mosaic_0001>

<llo_original>
// kernel: tpu_custom_call.1
$region0: #{tpu_custom_call.1}
  #allocation0 [shape = 'u32[]', space=smem, size = 0x4, offset = 0x4, fixed_abs, tag = 'smem constant byte address 0x4 - core index']
  #allocation1 [shape = 'u32[144,128]{1,0:T(1,128)}', space=vmem, size = 0x12000, scoped, tag = 'internal scratch']
  %s0 = inlined_call_operand.vmem [shape: f32[8,32], index: 0, kind: input, shape index: {}]
  %s1 = inlined_call_operand.vmem [shape: bf16[32,32], index: 1, kind: input, shape index: {}]
  %s2 = inlined_call_operand.vmem [shape: f32[1,32], index: 2, kind: input, shape index: {}]
  %s3 = inlined_call_operand.hbm [shape: bf16[32,32], index: 3, kind: input, shape index: {}]
  %s4 = inlined_call_operand.hbm [shape: f32[1,32], index: 4, kind: input, shape index: {}]
  %s5 = inlined_call_operand.vmem [shape: bf16[32,16], index: 5, kind: input, shape index: {}]
  %s6 = inlined_call_operand.vmem [shape: f32[1,16], index: 6, kind: input, shape index: {}]
  %s7 = inlined_call_operand.hbm [shape: f32[8,16], index: 7, kind: output, shape index: {}]
  %s8 = sld [smem:[#allocation0]]
  $region46: #{tpu_custom_call.1} parent=0
    _
  %s10 = ssub.s32 1, %s8
  %s11 = scalar_select 0, %s10, %s8
  $region1: #{tpu_custom_call.1} parent=0
    #allocation2 [shape = 'u8[8192]{0}', space=vmem, size = 0x2000, scoped, tag = 'input window, operand 3, single buffered']
    #allocation3 [shape = 's32[1]{0}', space=sflag, size = 0x4, scoped, tag = 'scoped memory for tpu_custom_call.1']
    #allocation4 [shape = 's32[1]{0}', space=sflag, size = 0x4, scoped, tag = 'scoped memory for tpu_custom_call.1']
    #allocation5 [shape = 'u8[512]{0}', space=vmem, size = 0x400, scoped, tag = 'input window, operand 4, single buffered']
    #allocation6 [shape = 's32[1]{0}', space=sflag, size = 0x4, scoped, tag = 'scoped memory for tpu_custom_call.1']
    #allocation7 [shape = 'u8[4096]{0}', space=vmem, size = 0x1000, scoped, tag = 'output window, operand 0, single buffered']
    %12 = vsyncpa [#allocation3], 0
    %13 = vsyncpa [#allocation6], 0
    %14 = vsyncpa [#allocation4], 0
    // Predicated region
    $region2: #{tpu_custom_call.1} parent=1 // pred_check
      _
    $region3: #{tpu_custom_call.1} parent=1 // pred_check_branch
      %16 = sbr.rel (0) target = $region5
    $region4: #{tpu_custom_call.1} parent=1 // pred_region
      _
    $region5: #{tpu_custom_call.1} parent=1 // pred_fallthru
      _
    // Predicated region
    $region6: #{tpu_custom_call.1} parent=1 // pred_check
      _
    $region7: #{tpu_custom_call.1} parent=1 // pred_check_branch
      %18 = sbr.rel (0) target = $region9
    $region8: #{tpu_custom_call.1} parent=1 // pred_region
      _
    $region9: #{tpu_custom_call.1} parent=1 // pred_fallthru
      _
    // Predicated region
    $region10: #{tpu_custom_call.1} parent=1 // pred_check
      _
    $region11: #{tpu_custom_call.1} parent=1 // pred_check_branch
      %20 = sbr.rel (0) target = $region13
    $region12: #{tpu_custom_call.1} parent=1 // pred_region
      _
    $region13: #{tpu_custom_call.1} parent=1 // pred_fallthru
      _
    // Predicated region
    $region14: #{tpu_custom_call.1} parent=1 // pred_check
      _
    $region15: #{tpu_custom_call.1} parent=1 // pred_check_branch
      %22 = sbr.rel (0) target = $region17
    $region16: #{tpu_custom_call.1} parent=1 // pred_region
      %s24 = ssub.s32 256, 256
      %25 = vsyncadd [#allocation3], %s24
      %s26 = sshll.u32 [#allocation2], 4
      %s27 = int_to_ptr.vmem [resolvable:$true] %s26
      %32 = dma.hbm_to_vmem [thread:$0]  %s3, 256, %s27, [#allocation3], 64, 64, 4
    $region17: #{tpu_custom_call.1} parent=1 // pred_fallthru
      _
    // Predicated region
    $region18: #{tpu_custom_call.1} parent=1 // pred_check
      _
    $region19: #{tpu_custom_call.1} parent=1 // pred_check_branch
      %34 = sbr.rel (0) target = $region21
    $region20: #{tpu_custom_call.1} parent=1 // pred_region
      %s36 = ssub.s32 16, 16
      %37 = vsyncadd [#allocation6], %s36
      %s39 = sshll.u32 [#allocation5], 4
      %s40 = int_to_ptr.vmem [resolvable:$true] %s39
      %42 = dma.hbm_to_vmem [thread:$0]  %s4, 16, %s40, [#allocation6]
    $region21: #{tpu_custom_call.1} parent=1 // pred_fallthru
      _
    // Predicated region
    $region22: #{tpu_custom_call.1} parent=1 // pred_check
      _
    $region23: #{tpu_custom_call.1} parent=1 // pred_check_branch
      %44 = sbr.rel (0) target = $region25
    $region24: #{tpu_custom_call.1} parent=1 // pred_region
      _
    $region25: #{tpu_custom_call.1} parent=1 // pred_fallthru
      _
    // Predicated region
    $region26: #{tpu_custom_call.1} parent=1 // pred_check
      _
    $region27: #{tpu_custom_call.1} parent=1 // pred_check_branch
      %46 = sbr.rel (0) target = $region29
    $region28: #{tpu_custom_call.1} parent=1 // pred_region
      _
    $region29: #{tpu_custom_call.1} parent=1 // pred_fallthru
      _
    // Predicated region
    $region30: #{tpu_custom_call.1} parent=1 // pred_check
      _
    $region31: #{tpu_custom_call.1} parent=1 // pred_check_branch
      %48 = sbr.rel (0) target = $region33
    $region32: #{tpu_custom_call.1} parent=1 // pred_region
      %49 = dma.done [#allocation3], 256
    $region33: #{tpu_custom_call.1} parent=1 // pred_fallthru
      _
    // Predicated region
    $region34: #{tpu_custom_call.1} parent=1 // pred_check
      _
    $region35: #{tpu_custom_call.1} parent=1 // pred_check_branch
      %51 = sbr.rel (0) target = $region37
    $region36: #{tpu_custom_call.1} parent=1 // pred_region
      %52 = dma.done [#allocation6], 16
    $region37: #{tpu_custom_call.1} parent=1 // pred_fallthru
      _
    %v54 = vld [vmem:[%s0] sm:$0xff]
    %v55 = vpack.c.bf16 %v54, %v54
    %v56 = vld [vmem:[%s1] sm:$0xf]
    %v57 = vld [vmem:[%s1 + $0x4] sm:$0xf]
    %v58 = vld [vmem:[%s1 + $0x8] sm:$0xf]
    %v59 = vld [vmem:[%s1 + $0xc] sm:$0xf]
    %v60 = vld [vmem:[%s2] sm:$0x1]
    %v62 = vlaneseq
    %v63 = vshrl.u32 %v62, 7
    %v64 = vsub.s32 0, %v63
    %v65 = vrot.slane %v60, %v64
    %v71 = vunpack.c.l.b16 %v56
    %v72 = vunpack.c.l.b16 %v57
    %v73 = vunpack.c.l.b16 %v58
    %v74 = vunpack.c.l.b16 %v59
    %v75 = vpack.c.b16 %v72, %v71
    %v76 = vpack.c.b16 %v74, %v73
    %vm79 = vcmask 261120
    %v81 = vsel %vm79, %v55, 0
    %83 = vmatprep.subr.bf16.mxu0 0
    %84 = vmatpush1.bf16.msra.mxu0 0
    %85 = vmatprep.subr.bf16.mxu0 0
    %86 = vmatpush1.bf16.msra.mxu0 0
    %87 = vmatprep.subr.bf16.mxu0 0
    %88 = vmatpush1.bf16.msra.mxu0 0
    %89 = vmatprep.subr.bf16.mxu0 0
    %90 = vmatpush1.bf16.msra.mxu0 0
    %91 = vmatprep.subr.bf16.mxu0 0
    %92 = vmatpush1.bf16.msra.mxu0 0
    %93 = vmatprep.subr.bf16.mxu0 0
    %94 = vmatpush1.bf16.msra.mxu0 0
    %95 = vmatprep.subr.bf16.mxu0 0
    %96 = vmatpush1.bf16.msra.mxu0 %v76
    %97 = vmatprep.subr.bf16.mxu0 0
    %98 = vmatpush1.bf16.msra.mxu0 %v75
    %99 = vmatprep.subr.bf16.mxu0 0
    %100 = vmatpush2.bf16.msra.mxu0 0
    %101 = vmatprep.subr.bf16.mxu0 0
    %102 = vmatpush2.bf16.msra.mxu0 0
    %103 = vmatprep.subr.bf16.mxu0 0
    %104 = vmatpush2.bf16.msra.mxu0 0
    %105 = vmatprep.subr.bf16.mxu0 0
    %106 = vmatpush2.bf16.msra.mxu0 0
    %107 = vmatprep.subr.bf16.mxu0 0
    %108 = vmatpush2.bf16.msra.mxu0 0
    %109 = vmatprep.subr.bf16.mxu0 0
    %110 = vmatpush2.bf16.msra.mxu0 0
    %111 = vmatprep.subr.bf16.mxu0 0
    %112 = vmatpush2.bf16.msra.mxu0 0
    %113 = vmatprep.subr.bf16.mxu0 0
    %114 = vmatpush2.bf16.msra.mxu0 0
    %115 = vmatprep.mubr.bf16.mxu0 0
    %116 = vmatmul.mubr.bf16.gmra.mxu0 %v81
    %v117 = vpop.f32.mrf.mxu0
    %v118 = vadd.f32 %v65, %v117
    %v119 = vpop.f32.mrf.mxu0
    %v120 = vpop.f32.mrf.mxu0
    %v121 = vpop.f32.mrf.mxu0
    %122 = vdwg.mxu0
    %v123 = vmax.f32 %v118, 0.0
    %v124 = vpack.c.bf16 %v123, %v123
    %v125 = vld [vmem:[#allocation2] sm:$0xf]
    %v126 = vld [vmem:[#allocation2 + $0x4] sm:$0xf]
    %v127 = vld [vmem:[#allocation2 + $0x8] sm:$0xf]
    %v128 = vld [vmem:[#allocation2 + $0xc] sm:$0xf]
    %v129 = vld [vmem:[#allocation5] sm:$0x1]
    %v131 = vlaneseq
    %v132 = vshrl.u32 %v131, 7
    %v133 = vsub.s32 0, %v132
    %v134 = vrot.slane %v129, %v133
    %v140 = vunpack.c.l.b16 %v125
    %v141 = vunpack.c.l.b16 %v126
    %v142 = vunpack.c.l.b16 %v127
    %v143 = vunpack.c.l.b16 %v128
    %v144 = vpack.c.b16 %v141, %v140
    %v145 = vpack.c.b16 %v143, %v142
    %v149 = vsel %vm79, %v124, 0
    %151 = vmatprep.subr.bf16.mxu0 0
    %152 = vmatpush1.bf16.msra.mxu0 0
    %153 = vmatprep.subr.bf16.mxu0 0
    %154 = vmatpush1.bf16.msra.mxu0 0
    %155 = vmatprep.subr.bf16.mxu0 0
    %156 = vmatpush1.bf16.msra.mxu0 0
    %157 = vmatprep.subr.bf16.mxu0 0
    %158 = vmatpush1.bf16.msra.mxu0 0
    %159 = vmatprep.subr.bf16.mxu0 0
    %160 = vmatpush1.bf16.msra.mxu0 0
    %161 = vmatprep.subr.bf16.mxu0 0
    %162 = vmatpush1.bf16.msra.mxu0 0
    %163 = vmatprep.subr.bf16.mxu0 0
    %164 = vmatpush1.bf16.msra.mxu0 %v145
    %165 = vmatprep.subr.bf16.mxu0 0
    %166 = vmatpush1.bf16.msra.mxu0 %v144
    %167 = vmatprep.subr.bf16.mxu0 0
    %168 = vmatpush2.bf16.msra.mxu0 0
    %169 = vmatprep.subr.bf16.mxu0 0
    %170 = vmatpush2.bf16.msra.mxu0 0
    %171 = vmatprep.subr.bf16.mxu0 0
    %172 = vmatpush2.bf16.msra.mxu0 0
    %173 = vmatprep.subr.bf16.mxu0 0
    %174 = vmatpush2.bf16.msra.mxu0 0
    %175 = vmatprep.subr.bf16.mxu0 0
    %176 = vmatpush2.bf16.msra.mxu0 0
    %177 = vmatprep.subr.bf16.mxu0 0
    %178 = vmatpush2.bf16.msra.mxu0 0
    %179 = vmatprep.subr.bf16.mxu0 0
    %180 = vmatpush2.bf16.msra.mxu0 0
    %181 = vmatprep.subr.bf16.mxu0 0
    %182 = vmatpush2.bf16.msra.mxu0 0
    %183 = vmatprep.mubr.bf16.mxu0 0
    %184 = vmatmul.mubr.bf16.gmra.mxu0 %v149
    %v185 = vpop.f32.mrf.mxu0
    %v186 = vadd.f32 %v134, %v185
    %v187 = vpop.f32.mrf.mxu0
    %v188 = vpop.f32.mrf.mxu0
    %v189 = vpop.f32.mrf.mxu0
    %190 = vdwg.mxu0
    %v191 = vmax.f32 %v186, 0.0
    %v192 = vpack.c.bf16 %v191, %v191
    %v193 = vld [vmem:[%s5] sm:$0xf]
    %v194 = vld [vmem:[%s5 + $0x4] sm:$0xf]
    %v195 = vld [vmem:[%s5 + $0x8] sm:$0xf]
    %v196 = vld [vmem:[%s5 + $0xc] sm:$0xf]
    %v197 = vld [vmem:[%s6] sm:$0x1]
    %v199 = vlaneseq
    %v200 = vshrl.u32 %v199, 7
    %v201 = vsub.s32 0, %v200
    %v202 = vrot.slane %v197, %v201
    %v208 = vunpack.c.l.b16 %v193
    %v209 = vunpack.c.l.b16 %v194
    %v210 = vunpack.c.l.b16 %v195
    %v211 = vunpack.c.l.b16 %v196
    %v212 = vpack.c.b16 %v209, %v208
    %v213 = vpack.c.b16 %v211, %v210
    %v217 = vsel %vm79, %v192, 0
    %219 = vmatprep.subr.bf16.mxu0 0
    %220 = vmatpush1.bf16.msra.mxu0 0
    %221 = vmatprep.subr.bf16.mxu0 0
    %222 = vmatpush1.bf16.msra.mxu0 0
    %223 = vmatprep.subr.bf16.mxu0 0
    %224 = vmatpush1.bf16.msra.mxu0 0
    %225 = vmatprep.subr.bf16.mxu0 0
    %226 = vmatpush1.bf16.msra.mxu0 0
    %227 = vmatprep.subr.bf16.mxu0 0
    %228 = vmatpush1.bf16.msra.mxu0 0
    %229 = vmatprep.subr.bf16.mxu0 0
    %230 = vmatpush1.bf16.msra.mxu0 0
    %231 = vmatprep.subr.bf16.mxu0 0
    %232 = vmatpush1.bf16.msra.mxu0 %v213
    %233 = vmatprep.subr.bf16.mxu0 0
    %234 = vmatpush1.bf16.msra.mxu0 %v212
    %235 = vmatprep.subr.bf16.mxu0 0
    %236 = vmatpush2.bf16.msra.mxu0 0
    %237 = vmatprep.subr.bf16.mxu0 0
    %238 = vmatpush2.bf16.msra.mxu0 0
    %239 = vmatprep.subr.bf16.mxu0 0
    %240 = vmatpush2.bf16.msra.mxu0 0
    %241 = vmatprep.subr.bf16.mxu0 0
    %242 = vmatpush2.bf16.msra.mxu0 0
    %243 = vmatprep.subr.bf16.mxu0 0
    %244 = vmatpush2.bf16.msra.mxu0 0
    %245 = vmatprep.subr.bf16.mxu0 0
    %246 = vmatpush2.bf16.msra.mxu0 0
    %247 = vmatprep.subr.bf16.mxu0 0
    %248 = vmatpush2.bf16.msra.mxu0 0
    %249 = vmatprep.subr.bf16.mxu0 0
    %250 = vmatpush2.bf16.msra.mxu0 0
    %251 = vmatprep.mubr.bf16.mxu0 0
    %252 = vmatmul.mubr.bf16.gmra.mxu0 %v217
    %v253 = vpop.f32.mrf.mxu0
    %v254 = vadd.f32 %v202, %v253
    %v255 = vpop.f32.mrf.mxu0
    %v256 = vpop.f32.mrf.mxu0
    %v257 = vpop.f32.mrf.mxu0
    %258 = vdwg.mxu0
    %vm259 = vcmask 130048
    %260 = vst.msk [vmem:[#allocation7] sm:$0xff] %vm259, %v254
    // Predicated region
    $region38: #{tpu_custom_call.1} parent=1 // pred_check
      _
    $region39: #{tpu_custom_call.1} parent=1 // pred_check_branch
      %262 = sbr.rel (0) target = $region41
    $region40: #{tpu_custom_call.1} parent=1 // pred_region
      %s264 = ssub.s32 128, 128
      %265 = vsyncadd [#allocation4], %s264
      %s267 = sshll.u32 [#allocation7], 4
      %s268 = int_to_ptr.vmem [resolvable:$true] %s267
      %270 = dma.vmem_to_hbm [thread:$0]  %s268, 128, %s7, [#allocation4]
    $region41: #{tpu_custom_call.1} parent=1 // pred_fallthru
      _
    // Predicated region
    $region42: #{tpu_custom_call.1} parent=1 // pred_check
      _
    $region43: #{tpu_custom_call.1} parent=1 // pred_check_branch
      %272 = sbr.rel (0) target = $region45
    $region44: #{tpu_custom_call.1} parent=1 // pred_region
      %273 = dma.done [#allocation4], 128
    $region45: #{tpu_custom_call.1} parent=1 // pred_fallthru
      _
    %274 = vsyncpa [#allocation3], 1
    %275 = vsyncpa [#allocation6], 1
    %276 = vsyncpa [#allocation4], 1

// kernel: tpu_custom_call.1
$region0: #{tpu_custom_call.1}
  #allocation0 [shape = 'u32[]', space=smem, size = 0x4, offset = 0x4, fixed_abs, tag = 'smem constant byte address 0x4 - core index']
  #allocation1 [shape = 'u32[144,128]{1,0:T(1,128)}', space=vmem, size = 0x12000, scoped, tag = 'internal scratch']
  %s0 = inlined_call_operand.vmem [shape: f32[8,32], index: 0, kind: input, shape index: {}]
  %s1 = inlined_call_operand.vmem [shape: bf16[32,32], index: 1, kind: input, shape index: {}]
  %s2 = inlined_call_operand.vmem [shape: f32[1,32], index: 2, kind: input, shape index: {}]
  %s3 = inlined_call_operand.hbm [shape: bf16[32,32], index: 3, kind: input, shape index: {}]
  %s4 = inlined_call_operand.hbm [shape: f32[1,32], index: 4, kind: input, shape index: {}]
  %s5 = inlined_call_operand.vmem [shape: bf16[32,16], index: 5, kind: input, shape index: {}]
  %s6 = inlined_call_operand.vmem [shape: f32[1,16], index: 6, kind: input, shape index: {}]
  %s7 = inlined_call_operand.hbm [shape: f32[8,16], index: 7, kind: output, shape index: {}]
  %s8 = sld [smem:[#allocation0]]
  $region46: #{tpu_custom_call.1} parent=0
    _
  %s10 = ssub.s32 1, %s8
  %s11 = scalar_select 0, %s10, %s8
  $region1: #{tpu_custom_call.1} parent=0
    #allocation2 [shape = 'u8[8192]{0}', space=vmem, size = 0x2000, scoped, tag = 'input window, operand 3, single buffered']
    #allocation3 [shape = 's32[1]{0}', space=sflag, size = 0x4, scoped, tag = 'scoped memory for tpu_custom_call.1']
    #allocation4 [shape = 's32[1]{0}', space=sflag, size = 0x4, scoped, tag = 'scoped memory for tpu_custom_call.1']
    #allocation5 [shape = 'u8[512]{0}', space=vmem, size = 0x400, scoped, tag = 'input window, operand 4, single buffered']
    #allocation6 [shape = 's32[1]{0}', space=sflag, size = 0x4, scoped, tag = 'scoped memory for tpu_custom_call.1']
    #allocation7 [shape = 'u8[4096]{0}', space=vmem, size = 0x1000, scoped, tag = 'output window, operand 0, single buffered']
    %12 = vsyncpa [#allocation3], 0
    %13 = vsyncpa [#allocation6], 0
    %14 = vsyncpa [#allocation4], 0
    // Predicated region
    $region2: #{tpu_custom_call.1} parent=1 // pred_check
      _
    $region3: #{tpu_custom_call.1} parent=1 // pred_check_branch
      %16 = sbr.rel (0) target = $region5
    $region4: #{tpu_custom_call.1} parent=1 // pred_region
      _
    $region5: #{tpu_custom_call.1} parent=1 // pred_fallthru
      _
    // Predicated region
    $region6: #{tpu_custom_call.1} parent=1 // pred_check
      _
    $region7: #{tpu_custom_call.1} parent=1 // pred_check_branch
      %18 = sbr.rel (0) target = $region9
    $region8: #{tpu_custom_call.1} parent=1 // pred_region
      _
    $region9: #{tpu_custom_call.1} parent=1 // pred_fallthru
      _
    // Predicated region
    $region10: #{tpu_custom_call.1} parent=1 // pred_check
      _
    $region11: #{tpu_custom_call.1} parent=1 // pred_check_branch
      %20 = sbr.rel (0) target = $region13
    $region12: #{tpu_custom_call.1} parent=1 // pred_region
      _
    $region13: #{tpu_custom_call.1} parent=1 // pred_fallthru
      _
    // Predicated region
    $region14: #{tpu_custom_call.1} parent=1 // pred_check
      _
    $region15: #{tpu_custom_call.1} parent=1 // pred_check_branch
      %22 = sbr.rel (0) target = $region17
    $region16: #{tpu_custom_call.1} parent=1 // pred_region
      %s24 = ssub.s32 256, 256
      %25 = vsyncadd [#allocation3], %s24
      %s26 = sshll.u32 [#allocation2], 4
      %s27 = int_to_ptr.vmem [resolvable:$true] %s26
      %32 = dma.hbm_to_vmem [thread:$0]  %s3, 256, %s27, [#allocation3], 64, 64, 4
    $region17: #{tpu_custom_call.1} parent=1 // pred_fallthru
      _
    // Predicated region
    $region18: #{tpu_custom_call.1} parent=1 // pred_check
      _
    $region19: #{tpu_custom_call.1} parent=1 // pred_check_branch
      %34 = sbr.rel (0) target = $region21
    $region20: #{tpu_custom_call.1} parent=1 // pred_region
      %s36 = ssub.s32 16, 16
      %37 = vsyncadd [#allocation6], %s36
      %s39 = sshll.u32 [#allocation5], 4
      %s40 = int_to_ptr.vmem [resolvable:$true] %s39
      %42 = dma.hbm_to_vmem [thread:$0]  %s4, 16, %s40, [#allocation6]
    $region21: #{tpu_custom_call.1} parent=1 // pred_fallthru
      _
    // Predicated region
    $region22: #{tpu_custom_call.1} parent=1 // pred_check
      _
    $region23: #{tpu_custom_call.1} parent=1 // pred_check_branch
      %44 = sbr.rel (0) target = $region25
    $region24: #{tpu_custom_call.1} parent=1 // pred_region
      _
    $region25: #{tpu_custom_call.1} parent=1 // pred_fallthru
      _
    // Predicated region
    $region26: #{tpu_custom_call.1} parent=1 // pred_check
      _
    $region27: #{tpu_custom_call.1} parent=1 // pred_check_branch
      %46 = sbr.rel (0) target = $region29
    $region28: #{tpu_custom_call.1} parent=1 // pred_region
      _
    $region29: #{tpu_custom_call.1} parent=1 // pred_fallthru
      _
    // Predicated region
    $region30: #{tpu_custom_call.1} parent=1 // pred_check
      _
    $region31: #{tpu_custom_call.1} parent=1 // pred_check_branch
      %48 = sbr.rel (0) target = $region33
    $region32: #{tpu_custom_call.1} parent=1 // pred_region
      %49 = dma.done [#allocation3], 256
    $region33: #{tpu_custom_call.1} parent=1 // pred_fallthru
      _
    // Predicated region
    $region34: #{tpu_custom_call.1} parent=1 // pred_check
      _
    $region35: #{tpu_custom_call.1} parent=1 // pred_check_branch
      %51 = sbr.rel (0) target = $region37
    $region36: #{tpu_custom_call.1} parent=1 // pred_region
      %52 = dma.done [#allocation6], 16
    $region37: #{tpu_custom_call.1} parent=1 // pred_fallthru
      _
    %v54 = vld [vmem:[%s0] sm:$0xff]
    %v55 = vpack.c.bf16 %v54, %v54
    %v56 = vld [vmem:[%s1] sm:$0xf]
    %v57 = vld [vmem:[%s1 + $0x4] sm:$0xf]
    %v58 = vld [vmem:[%s1 + $0x8] sm:$0xf]
    %v59 = vld [vmem:[%s1 + $0xc] sm:$0xf]
    %v60 = vld [vmem:[%s2] sm:$0x1]
    %v62 = vlaneseq
    %v63 = vshrl.u32 %v62, 7
    %v64 = vsub.s32 0, %v63
    %v65 = vrot.slane %v60, %v64
    %v71 = vunpack.c.l.b16 %v56
    %v72 = vunpack.c.l.b16 %v57
    %v73 = vunpack.c.l.b16 %v58
    %v74 = vunpack.c.l.b16 %v59
    %v75 = vpack.c.b16 %v72, %v71
    %v76 = vpack.c.b16 %v74, %v73
    %vm79 = vcmask 261120
    %v81 = vsel %vm79, %v55, 0
    %83 = vmatprep.subr.bf16.mxu0 0
    %84 = vmatpush1.bf16.msra.mxu0 0
    %85 = vmatprep.subr.bf16.mxu0 0
    %86 = vmatpush1.bf16.msra.mxu0 0
    %87 = vmatprep.subr.bf16.mxu0 0
    %88 = vmatpush1.bf16.msra.mxu0 0
    %89 = vmatprep.subr.bf16.mxu0 0
    %90 = vmatpush1.bf16.msra.mxu0 0
    %91 = vmatprep.subr.bf16.mxu0 0
    %92 = vmatpush1.bf16.msra.mxu0 0
    %93 = vmatprep.subr.bf16.mxu0 0
    %94 = vmatpush1.bf16.msra.mxu0 0
    %95 = vmatprep.subr.bf16.mxu0 0
    %96 = vmatpush1.bf16.msra.mxu0 %v76
    %97 = vmatprep.subr.bf16.mxu0 0
    %98 = vmatpush1.bf16.msra.mxu0 %v75
    %99 = vmatprep.subr.bf16.mxu0 0
    %100 = vmatpush2.bf16.msra.mxu0 0
    %101 = vmatprep.subr.bf16.mxu0 0
    %102 = vmatpush2.bf16.msra.mxu0 0
    %103 = vmatprep.subr.bf16.mxu0 0
    %104 = vmatpush2.bf16.msra.mxu0 0
    %105 = vmatprep.subr.bf16.mxu0 0
    %106 = vmatpush2.bf16.msra.mxu0 0
    %107 = vmatprep.subr.bf16.mxu0 0
    %108 = vmatpush2.bf16.msra.mxu0 0
    %109 = vmatprep.subr.bf16.mxu0 0
    %110 = vmatpush2.bf16.msra.mxu0 0
    %111 = vmatprep.subr.bf16.mxu0 0
    %112 = vmatpush2.bf16.msra.mxu0 0
    %113 = vmatprep.subr.bf16.mxu0 0
    %114 = vmatpush2.bf16.msra.mxu0 0
    %115 = vmatprep.mubr.bf16.mxu0 0
    %116 = vmatmul.mubr.bf16.gmra.mxu0 %v81
    %v117 = vpop.f32.mrf.mxu0
    %v118 = vadd.f32 %v65, %v117
    %v119 = vpop.f32.mrf.mxu0
    %v120 = vpop.f32.mrf.mxu0
    %v121 = vpop.f32.mrf.mxu0
    %122 = vdwg.mxu0
    %v123 = vmax.f32 %v118, 0.0
    %v124 = vpack.c.bf16 %v123, %v123
    %v125 = vld [vmem:[#allocation2] sm:$0xf]
    %v126 = vld [vmem:[#allocation2 + $0x4] sm:$0xf]
    %v127 = vld [vmem:[#allocation2 + $0x8] sm:$0xf]
    %v128 = vld [vmem:[#allocation2 + $0xc] sm:$0xf]
    %v129 = vld [vmem:[#allocation5] sm:$0x1]
    %v131 = vlaneseq
    %v132 = vshrl.u32 %v131, 7
    %v133 = vsub.s32 0, %v132
    %v134 = vrot.slane %v129, %v133
    %v140 = vunpack.c.l.b16 %v125
    %v141 = vunpack.c.l.b16 %v126
    %v142 = vunpack.c.l.b16 %v127
    %v143 = vunpack.c.l.b16 %v128
    %v144 = vpack.c.b16 %v141, %v140
    %v145 = vpack.c.b16 %v143, %v142
    %v149 = vsel %vm79, %v124, 0
    %151 = vmatprep.subr.bf16.mxu0 0
    %152 = vmatpush1.bf16.msra.mxu0 0
    %153 = vmatprep.subr.bf16.mxu0 0
    %154 = vmatpush1.bf16.msra.mxu0 0
    %155 = vmatprep.subr.bf16.mxu0 0
    %156 = vmatpush1.bf16.msra.mxu0 0
    %157 = vmatprep.subr.bf16.mxu0 0
    %158 = vmatpush1.bf16.msra.mxu0 0
    %159 = vmatprep.subr.bf16.mxu0 0
    %160 = vmatpush1.bf16.msra.mxu0 0
    %161 = vmatprep.subr.bf16.mxu0 0
    %162 = vmatpush1.bf16.msra.mxu0 0
    %163 = vmatprep.subr.bf16.mxu0 0
    %164 = vmatpush1.bf16.msra.mxu0 %v145
    %165 = vmatprep.subr.bf16.mxu0 0
    %166 = vmatpush1.bf16.msra.mxu0 %v144
    %167 = vmatprep.subr.bf16.mxu0 0
    %168 = vmatpush2.bf16.msra.mxu0 0
    %169 = vmatprep.subr.bf16.mxu0 0
    %170 = vmatpush2.bf16.msra.mxu0 0
    %171 = vmatprep.subr.bf16.mxu0 0
    %172 = vmatpush2.bf16.msra.mxu0 0
    %173 = vmatprep.subr.bf16.mxu0 0
    %174 = vmatpush2.bf16.msra.mxu0 0
    %175 = vmatprep.subr.bf16.mxu0 0
    %176 = vmatpush2.bf16.msra.mxu0 0
    %177 = vmatprep.subr.bf16.mxu0 0
    %178 = vmatpush2.bf16.msra.mxu0 0
    %179 = vmatprep.subr.bf16.mxu0 0
    %180 = vmatpush2.bf16.msra.mxu0 0
    %181 = vmatprep.subr.bf16.mxu0 0
    %182 = vmatpush2.bf16.msra.mxu0 0
    %183 = vmatprep.mubr.bf16.mxu0 0
    %184 = vmatmul.mubr.bf16.gmra.mxu0 %v149
    %v185 = vpop.f32.mrf.mxu0
    %v186 = vadd.f32 %v134, %v185
    %v187 = vpop.f32.mrf.mxu0
    %v188 = vpop.f32.mrf.mxu0
    %v189 = vpop.f32.mrf.mxu0
    %190 = vdwg.mxu0
    %v191 = vmax.f32 %v186, 0.0
    %v192 = vpack.c.bf16 %v191, %v191
    %v193 = vld [vmem:[%s5] sm:$0xf]
    %v194 = vld [vmem:[%s5 + $0x4] sm:$0xf]
    %v195 = vld [vmem:[%s5 + $0x8] sm:$0xf]
    %v196 = vld [vmem:[%s5 + $0xc] sm:$0xf]
    %v197 = vld [vmem:[%s6] sm:$0x1]
    %v199 = vlaneseq
    %v200 = vshrl.u32 %v199, 7
    %v201 = vsub.s32 0, %v200
    %v202 = vrot.slane %v197, %v201
    %v208 = vunpack.c.l.b16 %v193
    %v209 = vunpack.c.l.b16 %v194
    %v210 = vunpack.c.l.b16 %v195
    %v211 = vunpack.c.l.b16 %v196
    %v212 = vpack.c.b16 %v209, %v208
    %v213 = vpack.c.b16 %v211, %v210
    %v217 = vsel %vm79, %v192, 0
    %219 = vmatprep.subr.bf16.mxu0 0
    %220 = vmatpush1.bf16.msra.mxu0 0
    %221 = vmatprep.subr.bf16.mxu0 0
    %222 = vmatpush1.bf16.msra.mxu0 0
    %223 = vmatprep.subr.bf16.mxu0 0
    %224 = vmatpush1.bf16.msra.mxu0 0
    %225 = vmatprep.subr.bf16.mxu0 0
    %226 = vmatpush1.bf16.msra.mxu0 0
    %227 = vmatprep.subr.bf16.mxu0 0
    %228 = vmatpush1.bf16.msra.mxu0 0
    %229 = vmatprep.subr.bf16.mxu0 0
    %230 = vmatpush1.bf16.msra.mxu0 0
    %231 = vmatprep.subr.bf16.mxu0 0
    %232 = vmatpush1.bf16.msra.mxu0 %v213
    %233 = vmatprep.subr.bf16.mxu0 0
    %234 = vmatpush1.bf16.msra.mxu0 %v212
    %235 = vmatprep.subr.bf16.mxu0 0
    %236 = vmatpush2.bf16.msra.mxu0 0
    %237 = vmatprep.subr.bf16.mxu0 0
    %238 = vmatpush2.bf16.msra.mxu0 0
    %239 = vmatprep.subr.bf16.mxu0 0
    %240 = vmatpush2.bf16.msra.mxu0 0
    %241 = vmatprep.subr.bf16.mxu0 0
    %242 = vmatpush2.bf16.msra.mxu0 0
    %243 = vmatprep.subr.bf16.mxu0 0
    %244 = vmatpush2.bf16.msra.mxu0 0
    %245 = vmatprep.subr.bf16.mxu0 0
    %246 = vmatpush2.bf16.msra.mxu0 0
    %247 = vmatprep.subr.bf16.mxu0 0
    %248 = vmatpush2.bf16.msra.mxu0 0
    %249 = vmatprep.subr.bf16.mxu0 0
    %250 = vmatpush2.bf16.msra.mxu0 0
    %251 = vmatprep.mubr.bf16.mxu0 0
    %252 = vmatmul.mubr.bf16.gmra.mxu0 %v217
    %v253 = vpop.f32.mrf.mxu0
    %v254 = vadd.f32 %v202, %v253
    %v255 = vpop.f32.mrf.mxu0
    %v256 = vpop.f32.mrf.mxu0
    %v257 = vpop.f32.mrf.mxu0
    %258 = vdwg.mxu0
    %vm259 = vcmask 130048
    %260 = vst.msk [vmem:[#allocation7] sm:$0xff] %vm259, %v254
    // Predicated region
    $region38: #{tpu_custom_call.1} parent=1 // pred_check
      _
    $region39: #{tpu_custom_call.1} parent=1 // pred_check_branch
      %262 = sbr.rel (0) target = $region41
    $region40: #{tpu_custom_call.1} parent=1 // pred_region
      %s264 = ssub.s32 128, 128
      %265 = vsyncadd [#allocation4], %s264
      %s267 = sshll.u32 [#allocation7], 4
      %s268 = int_to_ptr.vmem [resolvable:$true] %s267
      %270 = dma.vmem_to_hbm [thread:$0]  %s268, 128, %s7, [#allocation4]
    $region41: #{tpu_custom_call.1} parent=1 // pred_fallthru
      _
    // Predicated region
    $region42: #{tpu_custom_call.1} parent=1 // pred_check
      _
    $region43: #{tpu_custom_call.1} parent=1 // pred_check_branch
      %272 = sbr.rel (0) target = $region45
    $region44: #{tpu_custom_call.1} parent=1 // pred_region
      %273 = dma.done [#allocation4], 128
    $region45: #{tpu_custom_call.1} parent=1 // pred_fallthru
      _
    %274 = vsyncpa [#allocation3], 1
    %275 = vsyncpa [#allocation6], 1
    %276 = vsyncpa [#allocation4], 1

</llo_original>
